<compile_context>
chip_gen: v7x
topology: tpu7x:2x2x1
jax: 0.10.0
libtpu: 0.0.40
codegen_flags: <defaults>
</compile_context>

<pallas_src>
import functools

import jax
import jax.numpy as jnp
from jax.experimental import pallas as pl
from jax.experimental.pallas import tpu as pltpu

IN_DIM = 64
HID_DIM = 256
OUT_DIM = 28 * 28          # 784
OUT_PAD = 896              # 7 * 128 -> lane-dense, unmasked stores
DEFAULT_TB = 512           # batch tile; sweep larger on v5e/v6e (128 MiB VMEM)


def _round_up(n, m):
    return ((n + m - 1) // m) * m


def _decoder_kernel(x_ref, w1_ref, b1_ref, w2_ref, b2_ref, o_ref):
    # x_ref:  (TB, 64)    bf16
    # w1_ref: (64, 256)   bf16   (resident across batch tiles)
    # b1_ref: (1, 256)    f32
    # w2_ref: (256, 896)  bf16   (resident, zero-padded cols 784:896)
    # b2_ref: (1, 896)    f32
    # o_ref:  (TB, 896)   f32
    x = x_ref[...]

    # Linear(64, 256) + ReLU : bf16 MXU matmul, f32 accumulation / elementwise.
    h = jnp.dot(x, w1_ref[...], preferred_element_type=jnp.float32) + b1_ref[...]
    h = jnp.maximum(h, 0.0)

    # Linear(256, 784->896) + Sigmoid : feed bf16 to the MXU, keep f32 math after.
    y = jnp.dot(h.astype(jnp.bfloat16), w2_ref[...],
                preferred_element_type=jnp.float32) + b2_ref[...]
    o_ref[...] = jax.nn.sigmoid(y)


@functools.partial(jax.jit, static_argnames=("tb",))
def _ae_decoder_impl(x, w1, b1, w2p, b2p, *, tb):
    B = x.shape[0]
    bp = _round_up(B, tb)

    # Pad batch to a multiple of TB and cast activations to bf16 for the MXU.
    x_pad = jnp.zeros((bp, IN_DIM), jnp.bfloat16).at[:B, :].set(
        x.astype(jnp.bfloat16))

    out_pad = pl.pallas_call(
        _decoder_kernel,
        out_shape=jax.ShapeDtypeStruct((bp, OUT_PAD), jnp.float32),
        grid_spec=pl.GridSpec(
            grid=(bp // tb,),
            in_specs=[
                pl.BlockSpec((tb, IN_DIM), lambda i: (i, 0)),        # x tile
                pl.BlockSpec((IN_DIM, HID_DIM), lambda i: (0, 0)),   # w1 (resident)
                pl.BlockSpec((1, HID_DIM), lambda i: (0, 0)),        # b1 (resident)
                pl.BlockSpec((HID_DIM, OUT_PAD), lambda i: (0, 0)),  # w2 (resident)
                pl.BlockSpec((1, OUT_PAD), lambda i: (0, 0)),        # b2 (resident)
            ],
            out_specs=pl.BlockSpec((tb, OUT_PAD), lambda i: (i, 0)),
        ),
        compiler_params=pltpu.CompilerParams(
            dimension_semantics=("parallel",),   # megacore sharding on v7x
        ),
    )(x_pad, w1, b1, w2p, b2p)

    return out_pad[:B, :OUT_DIM]


def prepare_params(w1, b1, w2, b2):
    """Convert f32 params in (in, out) layout to kernel layout.

    Weights -> bf16 (halved HBM traffic, MXU-native); w2/b2 zero-padded to 896
    columns for lane-dense output stores; biases kept f32 with shape (1, N).
    """
    w1k = jnp.asarray(w1, jnp.float32).astype(jnp.bfloat16)                  # (64, 256)
    b1k = jnp.asarray(b1, jnp.float32).reshape(1, HID_DIM)                   # (1, 256)
    w2k = jnp.zeros((HID_DIM, OUT_PAD), jnp.float32).at[:, :OUT_DIM].set(
        jnp.asarray(w2, jnp.float32)).astype(jnp.bfloat16)                   # (256, 896)
    b2k = jnp.zeros((1, OUT_PAD), jnp.float32).at[:, :OUT_DIM].set(
        jnp.asarray(b2, jnp.float32).reshape(1, OUT_DIM))                    # (1, 896)
    return w1k, b1k, w2k, b2k


def ae_decoder(x, params, tb=DEFAULT_TB):
    """x: (B, 64) f32. params: output of prepare_params. Returns (B, 784) f32."""
    w1k, b1k, w2k, b2k = params
    B = x.shape[0]
    # For small batches, collapse to one full-array block (keeps (8,128) rule happy);
    # otherwise tile at TB (multiple of 16, bf16-sublane friendly).
    tb_eff = min(int(tb), _round_up(B, 8))
    return _ae_decoder_impl(x, w1k, b1k, w2k, b2k, tb=tb_eff)


def init_params(key):
    """PyTorch nn.Linear-style init (uniform +-1/sqrt(fan_in)), stored as (in, out)."""
    k1, k2, k3, k4 = jax.random.split(key, 4)
    lim1 = 1.0 / jnp.sqrt(jnp.float32(IN_DIM))
    lim2 = 1.0 / jnp.sqrt(jnp.float32(HID_DIM))
    w1 = jax.random.uniform(k1, (IN_DIM, HID_DIM), jnp.float32, -lim1, lim1)
    b1 = jax.random.uniform(k2, (HID_DIM,), jnp.float32, -lim1, lim1)
    w2 = jax.random.uniform(k3, (HID_DIM, OUT_DIM), jnp.float32, -lim2, lim2)
    b2 = jax.random.uniform(k4, (OUT_DIM,), jnp.float32, -lim2, lim2)
    return w1, b1, w2, b2


def reference_bf16(x, w1, b1, w2, b2):
    """Pure-JAX reference mirroring the kernel's dtype policy (bf16 matmul inputs)."""
    h = jnp.dot(x.astype(jnp.bfloat16), w1.astype(jnp.bfloat16),
                preferred_element_type=jnp.float32) + b1.reshape(1, -1)
    h = jnp.maximum(h, 0.0)
    y = jnp.dot(h.astype(jnp.bfloat16), w2.astype(jnp.bfloat16),
                preferred_element_type=jnp.float32) + b2.reshape(1, -1)
    return jax.nn.sigmoid(y)


def reference_f32(x, w1, b1, w2, b2):
    h = jnp.maximum(x @ w1 + b1.reshape(1, -1), 0.0)
    return jax.nn.sigmoid(h @ w2 + b2.reshape(1, -1))


if __name__ == "__main__":
    key = jax.random.PRNGKey(0)
    k_params, k_x = jax.random.split(key)

    w1, b1, w2, b2 = init_params(k_params)
    params = prepare_params(w1, b1, w2, b2)

    batch = 8
    x = jax.random.normal(k_x, (batch, IN_DIM), jnp.float32)

    out = ae_decoder(x, params)
    out = jax.block_until_ready(out)

    assert out.shape == (batch, OUT_DIM)

    ref_b = reference_bf16(x, w1, b1, w2, b2)
    ref_f = reference_f32(x, w1, b1, w2, b2)
    # Tight vs a reference with identical dtype policy; loose vs the pure-f32 module
    # (bf16 weight quantization only; sigmoid output in [0, 1]).
    assert jnp.allclose(out, ref_b, atol=1e-3, rtol=1e-3), "mismatch vs bf16-matched reference"
    assert jnp.allclose(out, ref_f, atol=2e-2, rtol=0.0), "mismatch vs f32 reference"

    print("KERNEL_OK")
</pallas_src>

<mosaic_0001>
module attributes {stable_mosaic.version = 11 : i64} {
  func.func @_decoder_kernel(%arg0: i32, %arg1: memref<8x64xbf16, #tpu.memory_space<vmem>>, %arg2: memref<64x256xbf16, #tpu.memory_space<vmem>>, %arg3: memref<1x256xf32, #tpu.memory_space<vmem>>, %arg4: memref<256x896xbf16, #tpu.memory_space<vmem>>, %arg5: memref<1x896xf32, #tpu.memory_space<vmem>>, %arg6: memref<8x896xf32, #tpu.memory_space<vmem>>) attributes {dimension_semantics = [#tpu.dimension_semantics<parallel>], iteration_bounds = array<i64: 1>, scalar_prefetch = 0 : i64, scratch_operands = 0 : i64, tpu.core_type = #tpu.core_type<tc>, window_params = [{transform_indices = @transform_0, window_bounds = array<i64: 8, 64>}, {pipeline_mode = #tpu.pipeline_mode<synchronous>, transform_indices = @transform_1, window_bounds = array<i64: 64, 256>}, {pipeline_mode = #tpu.pipeline_mode<synchronous>, transform_indices = @transform_2, window_bounds = array<i64: 1, 256>}, {pipeline_mode = #tpu.pipeline_mode<synchronous>, transform_indices = @transform_3, window_bounds = array<i64: 256, 896>}, {pipeline_mode = #tpu.pipeline_mode<synchronous>, transform_indices = @transform_4, window_bounds = array<i64: 1, 896>}, {transform_indices = @transform_5, window_bounds = array<i64: 8, 896>}]} {
    %c0 = arith.constant 0 : index
    %c0_0 = arith.constant 0 : index
    %0 = vector.load %arg1[%c0, %c0_0] : memref<8x64xbf16, #tpu.memory_space<vmem>>, vector<8x64xbf16>
    %c0_1 = arith.constant 0 : index
    %c0_2 = arith.constant 0 : index
    %1 = vector.load %arg2[%c0_1, %c0_2] : memref<64x256xbf16, #tpu.memory_space<vmem>>, vector<64x256xbf16>
    %cst = arith.constant dense<0.000000e+00> : vector<8x256xf32>
    %2 = tpu.matmul %0, %1, %cst {dimension_numbers = #tpu.dot_dimension_numbers<[1], [0], [0], [1], [0, 0, 1, 1], [], []>} : vector<8x64xbf16>, vector<64x256xbf16>, vector<8x256xf32> -> vector<8x256xf32>
    %c0_3 = arith.constant 0 : index
    %c0_4 = arith.constant 0 : index
    %3 = vector.load %arg3[%c0_3, %c0_4] : memref<1x256xf32, #tpu.memory_space<vmem>>, vector<1x256xf32>
    %4 = vector.broadcast %3 : vector<1x256xf32> to vector<8x256xf32>
    %5 = arith.addf %2, %4 : vector<8x256xf32>
    %cst_5 = arith.constant 0.000000e+00 : f32
    %6 = vector.broadcast %cst_5 : f32 to vector<8x256xf32>
    %7 = arith.maximumf %5, %6 : vector<8x256xf32>
    %8 = arith.truncf %7 : vector<8x256xf32> to vector<8x256xbf16>
    %c0_6 = arith.constant 0 : index
    %c0_7 = arith.constant 0 : index
    %9 = vector.load %arg4[%c0_6, %c0_7] : memref<256x896xbf16, #tpu.memory_space<vmem>>, vector<256x896xbf16>
    %cst_8 = arith.constant dense<0.000000e+00> : vector<8x896xf32>
    %10 = tpu.matmul %8, %9, %cst_8 {dimension_numbers = #tpu.dot_dimension_numbers<[1], [0], [0], [1], [0, 0, 1, 1], [], []>} : vector<8x256xbf16>, vector<256x896xbf16>, vector<8x896xf32> -> vector<8x896xf32>
    %c0_9 = arith.constant 0 : index
    %c0_10 = arith.constant 0 : index
    %11 = vector.load %arg5[%c0_9, %c0_10] : memref<1x896xf32, #tpu.memory_space<vmem>>, vector<1x896xf32>
    %12 = vector.broadcast %11 : vector<1x896xf32> to vector<8x896xf32>
    %13 = arith.addf %10, %12 : vector<8x896xf32>
    %14 = arith.negf %13 : vector<8x896xf32>
    %15 = math.exp %14 : vector<8x896xf32>
    %cst_11 = arith.constant 1.000000e+00 : f32
    %16 = vector.broadcast %cst_11 : f32 to vector<8x896xf32>
    %17 = arith.addf %16, %15 : vector<8x896xf32>
    %18 = arith.divf %16, %17 : vector<8x896xf32>
    %c0_12 = arith.constant 0 : index
    %c0_13 = arith.constant 0 : index
    %19 = vector.load %arg6[%c0_12, %c0_13] : memref<8x896xf32, #tpu.memory_space<vmem>>, vector<8x896xf32>
    tpu.vector_store %arg6[%c0_12, %c0_13], %18 {strides = array<i32>} : memref<8x896xf32, #tpu.memory_space<vmem>>, vector<8x896xf32>,
    return
  }
  func.func @transform_0(%arg0: i32) -> (i32, i32) {
    %c0_i32 = arith.constant 0 : i32
    %c0_i32_0 = arith.constant 0 : i32
    return %arg0, %c0_i32 : i32, i32
  }
  func.func @transform_1(%arg0: i32) -> (i32, i32) {
    %c0_i32 = arith.constant 0 : i32
    %c0_i32_0 = arith.constant 0 : i32
    %c0_i32_1 = arith.constant 0 : i32
    return %c0_i32, %c0_i32_0 : i32, i32
  }
  func.func @transform_2(%arg0: i32) -> (i32, i32) {
    %c0_i32 = arith.constant 0 : i32
    %c0_i32_0 = arith.constant 0 : i32
    %c0_i32_1 = arith.constant 0 : i32
    return %c0_i32, %c0_i32_0 : i32, i32
  }
  func.func @transform_3(%arg0: i32) -> (i32, i32) {
    %c0_i32 = arith.constant 0 : i32
    %c0_i32_0 = arith.constant 0 : i32
    %c0_i32_1 = arith.constant 0 : i32
    return %c0_i32, %c0_i32_0 : i32, i32
  }
  func.func @transform_4(%arg0: i32) -> (i32, i32) {
    %c0_i32 = arith.constant 0 : i32
    %c0_i32_0 = arith.constant 0 : i32
    %c0_i32_1 = arith.constant 0 : i32
    return %c0_i32, %c0_i32_0 : i32, i32
  }
  func.func @transform_5(%arg0: i32) -> (i32, i32) {
    %c0_i32 = arith.constant 0 : i32
    %c0_i32_0 = arith.constant 0 : i32
    return %arg0, %c0_i32 : i32, i32
  }
}

</mosaic_0001>

<llo_original>
// kernel: _ae_decoder_impl.1
$region0: #{_ae_decoder_impl.1}
  #allocation0 [shape = 'u32[]', space=smem, size = 0x4, offset = 0x4, fixed_abs, tag = 'smem constant byte address 0x4 - core index']
  #allocation1 [shape = 'u32[144,128]{1,0:T(1,128)}', space=vmem, size = 0x12000, scoped, tag = 'internal scratch']
  %s0 = inlined_call_operand.vmem [shape: bf16[8,64], index: 0, kind: input, shape index: {}]
  %s1 = inlined_call_operand.hbm [shape: bf16[64,256], index: 1, kind: input, shape index: {}]
  %s2 = inlined_call_operand.vmem [shape: f32[1,256], index: 2, kind: input, shape index: {}]
  %s3 = inlined_call_operand.hbm [shape: bf16[256,896], index: 3, kind: input, shape index: {}]
  %s4 = inlined_call_operand.vmem [shape: f32[1,896], index: 4, kind: input, shape index: {}]
  %s5 = inlined_call_operand.hbm [shape: f32[8,896], index: 5, kind: output, shape index: {}]
  %s6 = sld [smem:[#allocation0]]
  $region38: #{_ae_decoder_impl.1} parent=0
    _
  %s8 = ssub.s32 1, %s6
  %s9 = scalar_select 0, %s8, %s6
  $region1: #{_ae_decoder_impl.1} parent=0
    #allocation2 [shape = 'u8[32768]{0}', space=vmem, size = 0x8000, scoped, tag = 'input window, operand 1, single buffered']
    #allocation3 [shape = 's32[1]{0}', space=sflag, size = 0x4, scoped, tag = 'scoped memory for _ae_decoder_impl.1']
    #allocation4 [shape = 's32[1]{0}', space=sflag, size = 0x4, scoped, tag = 'scoped memory for _ae_decoder_impl.1']
    #allocation5 [shape = 'u8[458752]{0}', space=vmem, size = 0x70000, scoped, tag = 'input window, operand 3, single buffered']
    #allocation6 [shape = 's32[1]{0}', space=sflag, size = 0x4, scoped, tag = 'scoped memory for _ae_decoder_impl.1']
    #allocation7 [shape = 'u8[28672]{0}', space=vmem, size = 0x7000, scoped, tag = 'output window, operand 0, single buffered']
    %10 = vsyncpa [#allocation3], 0
    %11 = vsyncpa [#allocation6], 0
    %12 = vsyncpa [#allocation4], 0
    // Predicated region
    $region2: #{_ae_decoder_impl.1} parent=1 // pred_check
      _
    $region3: #{_ae_decoder_impl.1} parent=1 // pred_check_branch
      %14 = sbr.rel (0) target = $region5
    $region4: #{_ae_decoder_impl.1} parent=1 // pred_region
      _
    $region5: #{_ae_decoder_impl.1} parent=1 // pred_fallthru
      _
    // Predicated region
    $region6: #{_ae_decoder_impl.1} parent=1 // pred_check
      _
    $region7: #{_ae_decoder_impl.1} parent=1 // pred_check_branch
      %16 = sbr.rel (0) target = $region9
    $region8: #{_ae_decoder_impl.1} parent=1 // pred_region
      %s18 = ssub.s32 1024, 1024
      %19 = vsyncadd [#allocation3], %s18
      %s20 = sshll.u32 [#allocation2], 4
      %s21 = int_to_ptr.vmem [resolvable:$true] %s20
      %26 = dma.hbm_to_vmem [thread:$0]  %s1, 1024, %s21, [#allocation3], 128, 128, 8
    $region9: #{_ae_decoder_impl.1} parent=1 // pred_fallthru
      _
    // Predicated region
    $region10: #{_ae_decoder_impl.1} parent=1 // pred_check
      _
    $region11: #{_ae_decoder_impl.1} parent=1 // pred_check_branch
      %28 = sbr.rel (0) target = $region13
    $region12: #{_ae_decoder_impl.1} parent=1 // pred_region
      _
    $region13: #{_ae_decoder_impl.1} parent=1 // pred_fallthru
      _
    // Predicated region
    $region14: #{_ae_decoder_impl.1} parent=1 // pred_check
      _
    $region15: #{_ae_decoder_impl.1} parent=1 // pred_check_branch
      %30 = sbr.rel (0) target = $region17
    $region16: #{_ae_decoder_impl.1} parent=1 // pred_region
      %s32 = ssub.s32 14336, 14336
      %33 = vsyncadd [#allocation6], %s32
      %s34 = sshll.u32 [#allocation5], 4
      %s35 = int_to_ptr.vmem [resolvable:$true] %s34
      %40 = dma.hbm_to_vmem [thread:$0]  %s3, 14336, %s35, [#allocation6], 448, 448, 28
    $region17: #{_ae_decoder_impl.1} parent=1 // pred_fallthru
      _
    // Predicated region
    $region18: #{_ae_decoder_impl.1} parent=1 // pred_check
      _
    $region19: #{_ae_decoder_impl.1} parent=1 // pred_check_branch
      %42 = sbr.rel (0) target = $region21
    $region20: #{_ae_decoder_impl.1} parent=1 // pred_region
      _
    $region21: #{_ae_decoder_impl.1} parent=1 // pred_fallthru
      _
    // Predicated region
    $region22: #{_ae_decoder_impl.1} parent=1 // pred_check
      _
    $region23: #{_ae_decoder_impl.1} parent=1 // pred_check_branch
      %44 = sbr.rel (0) target = $region25
    $region24: #{_ae_decoder_impl.1} parent=1 // pred_region
      %45 = dma.done [#allocation3], 1024
    $region25: #{_ae_decoder_impl.1} parent=1 // pred_fallthru
      _
    // Predicated region
    $region26: #{_ae_decoder_impl.1} parent=1 // pred_check
      _
    $region27: #{_ae_decoder_impl.1} parent=1 // pred_check_branch
      %47 = sbr.rel (0) target = $region29
    $region28: #{_ae_decoder_impl.1} parent=1 // pred_region
      %48 = dma.done [#allocation6], 14336
    $region29: #{_ae_decoder_impl.1} parent=1 // pred_fallthru
      _
    %v50 = vld [vmem:[%s0] sm:$0xf]
    %v51 = vld [vmem:[#allocation2] sm:$0xff]
    %v52 = vld [vmem:[#allocation2 + $0x8] sm:$0xff]
    %v53 = vld [vmem:[#allocation2 + $0x10] sm:$0xff]
    %v54 = vld [vmem:[#allocation2 + $0x18] sm:$0xff]
    %v55 = vld [vmem:[#allocation2 + $0x20] sm:$0xff]
    %v56 = vld [vmem:[#allocation2 + $0x28] sm:$0xff]
    %v57 = vld [vmem:[#allocation2 + $0x30] sm:$0xff]
    %v58 = vld [vmem:[#allocation2 + $0x38] sm:$0xff]
    %v59 = vld [vmem:[%s2] sm:$0x3]
    %v61 = vlaneseq
    %v62 = vshrl.u32 %v61, 7
    %v63 = vsub.s32 0, %v62
    %v64 = vrot.slane %v59, %v63
    %v65 = vlaneseq
    %v66 = vshrl.u32 %v65, 7
    %v67 = vsub.s32 1, %v66
    %v68 = vrot.slane %v59, %v67
    %v79 = vunpack.c.l.b16 %v51
    %v80 = vunpack.c.h.b16 %v51
    %v81 = vunpack.c.l.b16 %v52
    %v82 = vunpack.c.h.b16 %v52
    %v83 = vunpack.c.l.b16 %v53
    %v84 = vunpack.c.h.b16 %v53
    %v85 = vunpack.c.l.b16 %v54
    %v86 = vunpack.c.h.b16 %v54
    %v87 = vunpack.c.l.b16 %v55
    %v88 = vunpack.c.h.b16 %v55
    %v89 = vunpack.c.l.b16 %v56
    %v90 = vunpack.c.h.b16 %v56
    %v91 = vunpack.c.l.b16 %v57
    %v92 = vunpack.c.h.b16 %v57
    %v93 = vunpack.c.l.b16 %v58
    %v94 = vunpack.c.h.b16 %v58
    %v95 = vpack.c.b16 %v81, %v79
    %v96 = vpack.c.b16 %v82, %v80
    %v97 = vpack.c.b16 %v85, %v83
    %v98 = vpack.c.b16 %v86, %v84
    %v99 = vpack.c.b16 %v89, %v87
    %v100 = vpack.c.b16 %v90, %v88
    %v101 = vpack.c.b16 %v93, %v91
    %v102 = vpack.c.b16 %v94, %v92
    %vm111 = vcmask 523264
    %v113 = vsel %vm111, %v50, 0
    %115 = vmatprep.subr.bf16.mxu0 %v96
    %116 = vmatpush1.bf16.msra.mxu0 %v95
    %117 = vmatprep.subr.bf16.mxu0 %v98
    %118 = vmatpush1.bf16.msra.mxu0 %v97
    %119 = vmatprep.subr.bf16.mxu0 %v100
    %120 = vmatpush1.bf16.msra.mxu0 %v99
    %121 = vmatprep.subr.bf16.mxu0 %v102
    %122 = vmatpush1.bf16.msra.mxu0 %v101
    %123 = vmatprep.subr.bf16.mxu0 0
    %124 = vmatpush1.bf16.msra.mxu0 0
    %125 = vmatprep.subr.bf16.mxu0 0
    %126 = vmatpush1.bf16.msra.mxu0 0
    %127 = vmatprep.subr.bf16.mxu0 0
    %128 = vmatpush1.bf16.msra.mxu0 0
    %129 = vmatprep.subr.bf16.mxu0 0
    %130 = vmatpush1.bf16.msra.mxu0 0
    %131 = vmatprep.subr.bf16.mxu0 0
    %132 = vmatpush1.bf16.msra.mxu0 0
    %133 = vmatprep.subr.bf16.mxu0 0
    %134 = vmatpush1.bf16.msra.mxu0 0
    %135 = vmatprep.subr.bf16.mxu0 0
    %136 = vmatpush1.bf16.msra.mxu0 0
    %137 = vmatprep.subr.bf16.mxu0 0
    %138 = vmatpush1.bf16.msra.mxu0 0
    %139 = vmatprep.subr.bf16.mxu0 0
    %140 = vmatpush1.bf16.msra.mxu0 0
    %141 = vmatprep.subr.bf16.mxu0 0
    %142 = vmatpush1.bf16.msra.mxu0 0
    %143 = vmatprep.subr.bf16.mxu0 0
    %144 = vmatpush1.bf16.msra.mxu0 0
    %145 = vmatprep.subr.bf16.mxu0 0
    %146 = vmatpush1.bf16.msra.mxu0 0
    %147 = vmatprep.mubr.bf16.mxu0 0
    %148 = vmatmul.mubr.bf16.gmra.mrb[0].mxu0 %v113
    %v149 = vpop.f32.mrb[0].mxu0
    %v150 = vadd.f32 %v64, %v149
    %v151 = vpop.f32.mrb[0].mxu0
    %v152 = vadd.f32 %v68, %v151
    %v153 = vpop.f32.mrb[0].mxu0
    %v154 = vpop.f32.mrb[0].mxu0
    %155 = vdwg.mxu0
    %v156 = vmax.f32 %v150, 0.0
    %v157 = vmax.f32 %v152, 0.0
    %v158 = vpack.c.bf16 %v156, %v156
    %v159 = vpack.c.bf16 %v157, %v157
    %v160 = vld [vmem:[#allocation5] sm:$0xff]
    %v161 = vld [vmem:[#allocation5 + $0x8] sm:$0xff]
    %v162 = vld [vmem:[#allocation5 + $0x10] sm:$0xff]
    %v163 = vld [vmem:[#allocation5 + $0x18] sm:$0xf]
    %v164 = vld [vmem:[#allocation5 + $0x1c] sm:$0xff]
    %v165 = vld [vmem:[#allocation5 + $0x24] sm:$0xff]
    %v166 = vld [vmem:[#allocation5 + $0x2c] sm:$0xff]
    %v167 = vld [vmem:[#allocation5 + $0x34] sm:$0xf]
    %v168 = vld [vmem:[#allocation5 + $0x38] sm:$0xff]
    %v169 = vld [vmem:[#allocation5 + $0x40] sm:$0xff]
    %v170 = vld [vmem:[#allocation5 + $0x48] sm:$0xff]
    %v171 = vld [vmem:[#allocation5 + $0x50] sm:$0xf]
    %v172 = vld [vmem:[#allocation5 + $0x54] sm:$0xff]
    %v173 = vld [vmem:[#allocation5 + $0x5c] sm:$0xff]
    %v174 = vld [vmem:[#allocation5 + $0x64] sm:$0xff]
    %v175 = vld [vmem:[#allocation5 + $0x6c] sm:$0xf]
    %v176 = vld [vmem:[#allocation5 + $0x70] sm:$0xff]
    %v177 = vld [vmem:[#allocation5 + $0x78] sm:$0xff]
    %v178 = vld [vmem:[#allocation5 + $0x80] sm:$0xff]
    %v179 = vld [vmem:[#allocation5 + $0x88] sm:$0xf]
    %v180 = vld [vmem:[#allocation5 + $0x8c] sm:$0xff]
    %v181 = vld [vmem:[#allocation5 + $0x94] sm:$0xff]
    %v182 = vld [vmem:[#allocation5 + $0x9c] sm:$0xff]
    %v183 = vld [vmem:[#allocation5 + $0xa4] sm:$0xf]
    %v184 = vld [vmem:[#allocation5 + $0xa8] sm:$0xff]
    %v185 = vld [vmem:[#allocation5 + $0xb0] sm:$0xff]
    %v186 = vld [vmem:[#allocation5 + $0xb8] sm:$0xff]
    %v187 = vld [vmem:[#allocation5 + $0xc0] sm:$0xf]
    %v188 = vld [vmem:[#allocation5 + $0xc4] sm:$0xff]
    %v189 = vld [vmem:[#allocation5 + $0xcc] sm:$0xff]
    %v190 = vld [vmem:[#allocation5 + $0xd4] sm:$0xff]
    %v191 = vld [vmem:[#allocation5 + $0xdc] sm:$0xf]
    %v192 = vld [vmem:[#allocation5 + $0xe0] sm:$0xff]
    %v193 = vld [vmem:[#allocation5 + $0xe8] sm:$0xff]
    %v194 = vld [vmem:[#allocation5 + $0xf0] sm:$0xff]
    %v195 = vld [vmem:[#allocation5 + $0xf8] sm:$0xf]
    %v196 = vld [vmem:[#allocation5 + $0xfc] sm:$0xff]
    %v197 = vld [vmem:[#allocation5 + $0x104] sm:$0xff]
    %v198 = vld [vmem:[#allocation5 + $0x10c] sm:$0xff]
    %v199 = vld [vmem:[#allocation5 + $0x114] sm:$0xf]
    %v200 = vld [vmem:[#allocation5 + $0x118] sm:$0xff]
    %v201 = vld [vmem:[#allocation5 + $0x120] sm:$0xff]
    %v202 = vld [vmem:[#allocation5 + $0x128] sm:$0xff]
    %v203 = vld [vmem:[#allocation5 + $0x130] sm:$0xf]
    %v204 = vld [vmem:[#allocation5 + $0x134] sm:$0xff]
    %v205 = vld [vmem:[#allocation5 + $0x13c] sm:$0xff]
    %v206 = vld [vmem:[#allocation5 + $0x144] sm:$0xff]
    %v207 = vld [vmem:[#allocation5 + $0x14c] sm:$0xf]
    %v208 = vld [vmem:[#allocation5 + $0x150] sm:$0xff]
    %v209 = vld [vmem:[#allocation5 + $0x158] sm:$0xff]
    %v210 = vld [vmem:[#allocation5 + $0x160] sm:$0xff]
    %v211 = vld [vmem:[#allocation5 + $0x168] sm:$0xf]
    %v212 = vld [vmem:[#allocation5 + $0x16c] sm:$0xff]
    %v213 = vld [vmem:[#allocation5 + $0x174] sm:$0xff]
    %v214 = vld [vmem:[#allocation5 + $0x17c] sm:$0xff]
    %v215 = vld [vmem:[#allocation5 + $0x184] sm:$0xf]
    %v216 = vld [vmem:[#allocation5 + $0x188] sm:$0xff]
    %v217 = vld [vmem:[#allocation5 + $0x190] sm:$0xff]
    %v218 = vld [vmem:[#allocation5 + $0x198] sm:$0xff]
    %v219 = vld [vmem:[#allocation5 + $0x1a0] sm:$0xf]
    %v220 = vld [vmem:[#allocation5 + $0x1a4] sm:$0xff]
    %v221 = vld [vmem:[#allocation5 + $0x1ac] sm:$0xff]
    %v222 = vld [vmem:[#allocation5 + $0x1b4] sm:$0xff]
    %v223 = vld [vmem:[#allocation5 + $0x1bc] sm:$0xf]
    %v224 = vld [vmem:[#allocation5 + $0x1c0] sm:$0xff]
    %v225 = vld [vmem:[#allocation5 + $0x1c8] sm:$0xff]
    %v226 = vld [vmem:[#allocation5 + $0x1d0] sm:$0xff]
    %v227 = vld [vmem:[#allocation5 + $0x1d8] sm:$0xf]
    %v228 = vld [vmem:[#allocation5 + $0x1dc] sm:$0xff]
    %v229 = vld [vmem:[#allocation5 + $0x1e4] sm:$0xff]
    %v230 = vld [vmem:[#allocation5 + $0x1ec] sm:$0xff]
    %v231 = vld [vmem:[#allocation5 + $0x1f4] sm:$0xf]
    %v232 = vld [vmem:[#allocation5 + $0x1f8] sm:$0xff]
    %v233 = vld [vmem:[#allocation5 + $0x200] sm:$0xff]
    %v234 = vld [vmem:[#allocation5 + $0x208] sm:$0xff]
    %v235 = vld [vmem:[#allocation5 + $0x210] sm:$0xf]
    %v236 = vld [vmem:[#allocation5 + $0x214] sm:$0xff]
    %v237 = vld [vmem:[#allocation5 + $0x21c] sm:$0xff]
    %v238 = vld [vmem:[#allocation5 + $0x224] sm:$0xff]
    %v239 = vld [vmem:[#allocation5 + $0x22c] sm:$0xf]
    %v240 = vld [vmem:[#allocation5 + $0x230] sm:$0xff]
    %v241 = vld [vmem:[#allocation5 + $0x238] sm:$0xff]
    %v242 = vld [vmem:[#allocation5 + $0x240] sm:$0xff]
    %v243 = vld [vmem:[#allocation5 + $0x248] sm:$0xf]
    %v244 = vld [vmem:[#allocation5 + $0x24c] sm:$0xff]
    %v245 = vld [vmem:[#allocation5 + $0x254] sm:$0xff]
    %v246 = vld [vmem:[#allocation5 + $0x25c] sm:$0xff]
    %v247 = vld [vmem:[#allocation5 + $0x264] sm:$0xf]
    %v248 = vld [vmem:[#allocation5 + $0x268] sm:$0xff]
    %v249 = vld [vmem:[#allocation5 + $0x270] sm:$0xff]
    %v250 = vld [vmem:[#allocation5 + $0x278] sm:$0xff]
    %v251 = vld [vmem:[#allocation5 + $0x280] sm:$0xf]
    %v252 = vld [vmem:[#allocation5 + $0x284] sm:$0xff]
    %v253 = vld [vmem:[#allocation5 + $0x28c] sm:$0xff]
    %v254 = vld [vmem:[#allocation5 + $0x294] sm:$0xff]
    %v255 = vld [vmem:[#allocation5 + $0x29c] sm:$0xf]
    %v256 = vld [vmem:[#allocation5 + $0x2a0] sm:$0xff]
    %v257 = vld [vmem:[#allocation5 + $0x2a8] sm:$0xff]
    %v258 = vld [vmem:[#allocation5 + $0x2b0] sm:$0xff]
    %v259 = vld [vmem:[#allocation5 + $0x2b8] sm:$0xf]
    %v260 = vld [vmem:[#allocation5 + $0x2bc] sm:$0xff]
    %v261 = vld [vmem:[#allocation5 + $0x2c4] sm:$0xff]
    %v262 = vld [vmem:[#allocation5 + $0x2cc] sm:$0xff]
    %v263 = vld [vmem:[#allocation5 + $0x2d4] sm:$0xf]
    %v264 = vld [vmem:[#allocation5 + $0x2d8] sm:$0xff]
    %v265 = vld [vmem:[#allocation5 + $0x2e0] sm:$0xff]
    %v266 = vld [vmem:[#allocation5 + $0x2e8] sm:$0xff]
    %v267 = vld [vmem:[#allocation5 + $0x2f0] sm:$0xf]
    %v268 = vld [vmem:[#allocation5 + $0x2f4] sm:$0xff]
    %v269 = vld [vmem:[#allocation5 + $0x2fc] sm:$0xff]
    %v270 = vld [vmem:[#allocation5 + $0x304] sm:$0xff]
    %v271 = vld [vmem:[#allocation5 + $0x30c] sm:$0xf]
    %v272 = vld [vmem:[#allocation5 + $0x310] sm:$0xff]
    %v273 = vld [vmem:[#allocation5 + $0x318] sm:$0xff]
    %v274 = vld [vmem:[#allocation5 + $0x320] sm:$0xff]
    %v275 = vld [vmem:[#allocation5 + $0x328] sm:$0xf]
    %v276 = vld [vmem:[#allocation5 + $0x32c] sm:$0xff]
    %v277 = vld [vmem:[#allocation5 + $0x334] sm:$0xff]
    %v278 = vld [vmem:[#allocation5 + $0x33c] sm:$0xff]
    %v279 = vld [vmem:[#allocation5 + $0x344] sm:$0xf]
    %v280 = vld [vmem:[#allocation5 + $0x348] sm:$0xff]
    %v281 = vld [vmem:[#allocation5 + $0x350] sm:$0xff]
    %v282 = vld [vmem:[#allocation5 + $0x358] sm:$0xff]
    %v283 = vld [vmem:[#allocation5 + $0x360] sm:$0xf]
    %v284 = vld [vmem:[#allocation5 + $0x364] sm:$0xff]
    %v285 = vld [vmem:[#allocation5 + $0x36c] sm:$0xff]
    %v286 = vld [vmem:[#allocation5 + $0x374] sm:$0xff]
    %v287 = vld [vmem:[#allocation5 + $0x37c] sm:$0xf]
    %v288 = vld [vmem:[%s4] sm:$0xff]
    %v290 = vlaneseq
    %v291 = vshrl.u32 %v290, 7
    %v292 = vsub.s32 0, %v291
    %v293 = vrot.slane %v288, %v292
    %v294 = vlaneseq
    %v295 = vshrl.u32 %v294, 7
    %v296 = vsub.s32 1, %v295
    %v297 = vrot.slane %v288, %v296
    %v298 = vlaneseq
    %v299 = vshrl.u32 %v298, 7
    %v300 = vsub.s32 2, %v299
    %v301 = vrot.slane %v288, %v300
    %v302 = vlaneseq
    %v303 = vshrl.u32 %v302, 7
    %v304 = vsub.s32 3, %v303
    %v305 = vrot.slane %v288, %v304
    %v306 = vlaneseq
    %v307 = vshrl.u32 %v306, 7
    %v308 = vsub.s32 4, %v307
    %v309 = vrot.slane %v288, %v308
    %v310 = vlaneseq
    %v311 = vshrl.u32 %v310, 7
    %v312 = vsub.s32 5, %v311
    %v313 = vrot.slane %v288, %v312
    %v314 = vlaneseq
    %v315 = vshrl.u32 %v314, 7
    %v316 = vsub.s32 6, %v315
    %v317 = vrot.slane %v288, %v316
    %v453 = vunpack.c.l.b16 %v160
    %v454 = vunpack.c.h.b16 %v160
    %v455 = vunpack.c.l.b16 %v161
    %v456 = vunpack.c.h.b16 %v161
    %v457 = vunpack.c.l.b16 %v162
    %v458 = vunpack.c.h.b16 %v162
    %v459 = vunpack.c.l.b16 %v163
    %v460 = vunpack.c.l.b16 %v164
    %v461 = vunpack.c.h.b16 %v164
    %v462 = vunpack.c.l.b16 %v165
    %v463 = vunpack.c.h.b16 %v165
    %v464 = vunpack.c.l.b16 %v166
    %v465 = vunpack.c.h.b16 %v166
    %v466 = vunpack.c.l.b16 %v167
    %v467 = vunpack.c.l.b16 %v168
    %v468 = vunpack.c.h.b16 %v168
    %v469 = vunpack.c.l.b16 %v169
    %v470 = vunpack.c.h.b16 %v169
    %v471 = vunpack.c.l.b16 %v170
    %v472 = vunpack.c.h.b16 %v170
    %v473 = vunpack.c.l.b16 %v171
    %v474 = vunpack.c.l.b16 %v172
    %v475 = vunpack.c.h.b16 %v172
    %v476 = vunpack.c.l.b16 %v173
    %v477 = vunpack.c.h.b16 %v173
    %v478 = vunpack.c.l.b16 %v174
    %v479 = vunpack.c.h.b16 %v174
    %v480 = vunpack.c.l.b16 %v175
    %v481 = vunpack.c.l.b16 %v176
    %v482 = vunpack.c.h.b16 %v176
    %v483 = vunpack.c.l.b16 %v177
    %v484 = vunpack.c.h.b16 %v177
    %v485 = vunpack.c.l.b16 %v178
    %v486 = vunpack.c.h.b16 %v178
    %v487 = vunpack.c.l.b16 %v179
    %v488 = vunpack.c.l.b16 %v180
    %v489 = vunpack.c.h.b16 %v180
    %v490 = vunpack.c.l.b16 %v181
    %v491 = vunpack.c.h.b16 %v181
    %v492 = vunpack.c.l.b16 %v182
    %v493 = vunpack.c.h.b16 %v182
    %v494 = vunpack.c.l.b16 %v183
    %v495 = vunpack.c.l.b16 %v184
    %v496 = vunpack.c.h.b16 %v184
    %v497 = vunpack.c.l.b16 %v185
    %v498 = vunpack.c.h.b16 %v185
    %v499 = vunpack.c.l.b16 %v186
    %v500 = vunpack.c.h.b16 %v186
    %v501 = vunpack.c.l.b16 %v187
    %v502 = vunpack.c.l.b16 %v188
    %v503 = vunpack.c.h.b16 %v188
    %v504 = vunpack.c.l.b16 %v189
    %v505 = vunpack.c.h.b16 %v189
    %v506 = vunpack.c.l.b16 %v190
    %v507 = vunpack.c.h.b16 %v190
    %v508 = vunpack.c.l.b16 %v191
    %v509 = vunpack.c.l.b16 %v192
    %v510 = vunpack.c.h.b16 %v192
    %v511 = vunpack.c.l.b16 %v193
    %v512 = vunpack.c.h.b16 %v193
    %v513 = vunpack.c.l.b16 %v194
    %v514 = vunpack.c.h.b16 %v194
    %v515 = vunpack.c.l.b16 %v195
    %v516 = vunpack.c.l.b16 %v196
    %v517 = vunpack.c.h.b16 %v196
    %v518 = vunpack.c.l.b16 %v197
    %v519 = vunpack.c.h.b16 %v197
    %v520 = vunpack.c.l.b16 %v198
    %v521 = vunpack.c.h.b16 %v198
    %v522 = vunpack.c.l.b16 %v199
    %v523 = vunpack.c.l.b16 %v200
    %v524 = vunpack.c.h.b16 %v200
    %v525 = vunpack.c.l.b16 %v201
    %v526 = vunpack.c.h.b16 %v201
    %v527 = vunpack.c.l.b16 %v202
    %v528 = vunpack.c.h.b16 %v202
    %v529 = vunpack.c.l.b16 %v203
    %v530 = vunpack.c.l.b16 %v204
    %v531 = vunpack.c.h.b16 %v204
    %v532 = vunpack.c.l.b16 %v205
    %v533 = vunpack.c.h.b16 %v205
    %v534 = vunpack.c.l.b16 %v206
    %v535 = vunpack.c.h.b16 %v206
    %v536 = vunpack.c.l.b16 %v207
    %v537 = vunpack.c.l.b16 %v208
    %v538 = vunpack.c.h.b16 %v208
    %v539 = vunpack.c.l.b16 %v209
    %v540 = vunpack.c.h.b16 %v209
    %v541 = vunpack.c.l.b16 %v210
    %v542 = vunpack.c.h.b16 %v210
    %v543 = vunpack.c.l.b16 %v211
    %v544 = vunpack.c.l.b16 %v212
    %v545 = vunpack.c.h.b16 %v212
    %v546 = vunpack.c.l.b16 %v213
    %v547 = vunpack.c.h.b16 %v213
    %v548 = vunpack.c.l.b16 %v214
    %v549 = vunpack.c.h.b16 %v214
    %v550 = vunpack.c.l.b16 %v215
    %v551 = vunpack.c.l.b16 %v216
    %v552 = vunpack.c.h.b16 %v216
    %v553 = vunpack.c.l.b16 %v217
    %v554 = vunpack.c.h.b16 %v217
    %v555 = vunpack.c.l.b16 %v218
    %v556 = vunpack.c.h.b16 %v218
    %v557 = vunpack.c.l.b16 %v219
    %v558 = vunpack.c.l.b16 %v220
    %v559 = vunpack.c.h.b16 %v220
    %v560 = vunpack.c.l.b16 %v221
    %v561 = vunpack.c.h.b16 %v221
    %v562 = vunpack.c.l.b16 %v222
    %v563 = vunpack.c.h.b16 %v222
    %v564 = vunpack.c.l.b16 %v223
    %v565 = vunpack.c.l.b16 %v224
    %v566 = vunpack.c.h.b16 %v224
    %v567 = vunpack.c.l.b16 %v225
    %v568 = vunpack.c.h.b16 %v225
    %v569 = vunpack.c.l.b16 %v226
    %v570 = vunpack.c.h.b16 %v226
    %v571 = vunpack.c.l.b16 %v227
    %v572 = vunpack.c.l.b16 %v228
    %v573 = vunpack.c.h.b16 %v228
    %v574 = vunpack.c.l.b16 %v229
    %v575 = vunpack.c.h.b16 %v229
    %v576 = vunpack.c.l.b16 %v230
    %v577 = vunpack.c.h.b16 %v230
    %v578 = vunpack.c.l.b16 %v231
    %v579 = vunpack.c.l.b16 %v232
    %v580 = vunpack.c.h.b16 %v232
    %v581 = vunpack.c.l.b16 %v233
    %v582 = vunpack.c.h.b16 %v233
    %v583 = vunpack.c.l.b16 %v234
    %v584 = vunpack.c.h.b16 %v234
    %v585 = vunpack.c.l.b16 %v235
    %v586 = vunpack.c.l.b16 %v236
    %v587 = vunpack.c.h.b16 %v236
    %v588 = vunpack.c.l.b16 %v237
    %v589 = vunpack.c.h.b16 %v237
    %v590 = vunpack.c.l.b16 %v238
    %v591 = vunpack.c.h.b16 %v238
    %v592 = vunpack.c.l.b16 %v239
    %v593 = vunpack.c.l.b16 %v240
    %v594 = vunpack.c.h.b16 %v240
    %v595 = vunpack.c.l.b16 %v241
    %v596 = vunpack.c.h.b16 %v241
    %v597 = vunpack.c.l.b16 %v242
    %v598 = vunpack.c.h.b16 %v242
    %v599 = vunpack.c.l.b16 %v243
    %v600 = vunpack.c.l.b16 %v244
    %v601 = vunpack.c.h.b16 %v244
    %v602 = vunpack.c.l.b16 %v245
    %v603 = vunpack.c.h.b16 %v245
    %v604 = vunpack.c.l.b16 %v246
    %v605 = vunpack.c.h.b16 %v246
    %v606 = vunpack.c.l.b16 %v247
    %v607 = vunpack.c.l.b16 %v248
    %v608 = vunpack.c.h.b16 %v248
    %v609 = vunpack.c.l.b16 %v249
    %v610 = vunpack.c.h.b16 %v249
    %v611 = vunpack.c.l.b16 %v250
    %v612 = vunpack.c.h.b16 %v250
    %v613 = vunpack.c.l.b16 %v251
    %v614 = vunpack.c.l.b16 %v252
    %v615 = vunpack.c.h.b16 %v252
    %v616 = vunpack.c.l.b16 %v253
    %v617 = vunpack.c.h.b16 %v253
    %v618 = vunpack.c.l.b16 %v254
    %v619 = vunpack.c.h.b16 %v254
    %v620 = vunpack.c.l.b16 %v255
    %v621 = vunpack.c.l.b16 %v256
    %v622 = vunpack.c.h.b16 %v256
    %v623 = vunpack.c.l.b16 %v257
    %v624 = vunpack.c.h.b16 %v257
    %v625 = vunpack.c.l.b16 %v258
    %v626 = vunpack.c.h.b16 %v258
    %v627 = vunpack.c.l.b16 %v259
    %v628 = vunpack.c.l.b16 %v260
    %v629 = vunpack.c.h.b16 %v260
    %v630 = vunpack.c.l.b16 %v261
    %v631 = vunpack.c.h.b16 %v261
    %v632 = vunpack.c.l.b16 %v262
    %v633 = vunpack.c.h.b16 %v262
    %v634 = vunpack.c.l.b16 %v263
    %v635 = vunpack.c.l.b16 %v264
    %v636 = vunpack.c.h.b16 %v264
    %v637 = vunpack.c.l.b16 %v265
    %v638 = vunpack.c.h.b16 %v265
    %v639 = vunpack.c.l.b16 %v266
    %v640 = vunpack.c.h.b16 %v266
    %v641 = vunpack.c.l.b16 %v267
    %v642 = vunpack.c.l.b16 %v268
    %v643 = vunpack.c.h.b16 %v268
    %v644 = vunpack.c.l.b16 %v269
    %v645 = vunpack.c.h.b16 %v269
    %v646 = vunpack.c.l.b16 %v270
    %v647 = vunpack.c.h.b16 %v270
    %v648 = vunpack.c.l.b16 %v271
    %v649 = vunpack.c.l.b16 %v272
    %v650 = vunpack.c.h.b16 %v272
    %v651 = vunpack.c.l.b16 %v273
    %v652 = vunpack.c.h.b16 %v273
    %v653 = vunpack.c.l.b16 %v274
    %v654 = vunpack.c.h.b16 %v274
    %v655 = vunpack.c.l.b16 %v275
    %v656 = vunpack.c.l.b16 %v276
    %v657 = vunpack.c.h.b16 %v276
    %v658 = vunpack.c.l.b16 %v277
    %v659 = vunpack.c.h.b16 %v277
    %v660 = vunpack.c.l.b16 %v278
    %v661 = vunpack.c.h.b16 %v278
    %v662 = vunpack.c.l.b16 %v279
    %v663 = vunpack.c.l.b16 %v280
    %v664 = vunpack.c.h.b16 %v280
    %v665 = vunpack.c.l.b16 %v281
    %v666 = vunpack.c.h.b16 %v281
    %v667 = vunpack.c.l.b16 %v282
    %v668 = vunpack.c.h.b16 %v282
    %v669 = vunpack.c.l.b16 %v283
    %v670 = vunpack.c.l.b16 %v284
    %v671 = vunpack.c.h.b16 %v284
    %v672 = vunpack.c.l.b16 %v285
    %v673 = vunpack.c.h.b16 %v285
    %v674 = vunpack.c.l.b16 %v286
    %v675 = vunpack.c.h.b16 %v286
    %v676 = vunpack.c.l.b16 %v287
    %v677 = vpack.c.b16 %v460, %v453
    %v678 = vpack.c.b16 %v461, %v454
    %v679 = vpack.c.b16 %v462, %v455
    %v680 = vpack.c.b16 %v463, %v456
    %v681 = vpack.c.b16 %v464, %v457
    %v682 = vpack.c.b16 %v465, %v458
    %v683 = vpack.c.b16 %v466, %v459
    %v684 = vpack.c.b16 %v474, %v467
    %v685 = vpack.c.b16 %v475, %v468
    %v686 = vpack.c.b16 %v476, %v469
    %v687 = vpack.c.b16 %v477, %v470
    %v688 = vpack.c.b16 %v478, %v471
    %v689 = vpack.c.b16 %v479, %v472
    %v690 = vpack.c.b16 %v480, %v473
    %v691 = vpack.c.b16 %v488, %v481
    %v692 = vpack.c.b16 %v489, %v482
    %v693 = vpack.c.b16 %v490, %v483
    %v694 = vpack.c.b16 %v491, %v484
    %v695 = vpack.c.b16 %v492, %v485
    %v696 = vpack.c.b16 %v493, %v486
    %v697 = vpack.c.b16 %v494, %v487
    %v698 = vpack.c.b16 %v502, %v495
    %v699 = vpack.c.b16 %v503, %v496
    %v700 = vpack.c.b16 %v504, %v497
    %v701 = vpack.c.b16 %v505, %v498
    %v702 = vpack.c.b16 %v506, %v499
    %v703 = vpack.c.b16 %v507, %v500
    %v704 = vpack.c.b16 %v508, %v501
    %v705 = vpack.c.b16 %v516, %v509
    %v706 = vpack.c.b16 %v517, %v510
    %v707 = vpack.c.b16 %v518, %v511
    %v708 = vpack.c.b16 %v519, %v512
    %v709 = vpack.c.b16 %v520, %v513
    %v710 = vpack.c.b16 %v521, %v514
    %v711 = vpack.c.b16 %v522, %v515
    %v712 = vpack.c.b16 %v530, %v523
    %v713 = vpack.c.b16 %v531, %v524
    %v714 = vpack.c.b16 %v532, %v525
    %v715 = vpack.c.b16 %v533, %v526
    %v716 = vpack.c.b16 %v534, %v527
    %v717 = vpack.c.b16 %v535, %v528
    %v718 = vpack.c.b16 %v536, %v529
    %v719 = vpack.c.b16 %v544, %v537
    %v720 = vpack.c.b16 %v545, %v538
    %v721 = vpack.c.b16 %v546, %v539
    %v722 = vpack.c.b16 %v547, %v540
    %v723 = vpack.c.b16 %v548, %v541
    %v724 = vpack.c.b16 %v549, %v542
    %v725 = vpack.c.b16 %v550, %v543
    %v726 = vpack.c.b16 %v558, %v551
    %v727 = vpack.c.b16 %v559, %v552
    %v728 = vpack.c.b16 %v560, %v553
    %v729 = vpack.c.b16 %v561, %v554
    %v730 = vpack.c.b16 %v562, %v555
    %v731 = vpack.c.b16 %v563, %v556
    %v732 = vpack.c.b16 %v564, %v557
    %v733 = vpack.c.b16 %v572, %v565
    %v734 = vpack.c.b16 %v573, %v566
    %v735 = vpack.c.b16 %v574, %v567
    %v736 = vpack.c.b16 %v575, %v568
    %v737 = vpack.c.b16 %v576, %v569
    %v738 = vpack.c.b16 %v577, %v570
    %v739 = vpack.c.b16 %v578, %v571
    %v740 = vpack.c.b16 %v586, %v579
    %v741 = vpack.c.b16 %v587, %v580
    %v742 = vpack.c.b16 %v588, %v581
    %v743 = vpack.c.b16 %v589, %v582
    %v744 = vpack.c.b16 %v590, %v583
    %v745 = vpack.c.b16 %v591, %v584
    %v746 = vpack.c.b16 %v592, %v585
    %v747 = vpack.c.b16 %v600, %v593
    %v748 = vpack.c.b16 %v601, %v594
    %v749 = vpack.c.b16 %v602, %v595
    %v750 = vpack.c.b16 %v603, %v596
    %v751 = vpack.c.b16 %v604, %v597
    %v752 = vpack.c.b16 %v605, %v598
    %v753 = vpack.c.b16 %v606, %v599
    %v754 = vpack.c.b16 %v614, %v607
    %v755 = vpack.c.b16 %v615, %v608
    %v756 = vpack.c.b16 %v616, %v609
    %v757 = vpack.c.b16 %v617, %v610
    %v758 = vpack.c.b16 %v618, %v611
    %v759 = vpack.c.b16 %v619, %v612
    %v760 = vpack.c.b16 %v620, %v613
    %v761 = vpack.c.b16 %v628, %v621
    %v762 = vpack.c.b16 %v629, %v622
    %v763 = vpack.c.b16 %v630, %v623
    %v764 = vpack.c.b16 %v631, %v624
    %v765 = vpack.c.b16 %v632, %v625
    %v766 = vpack.c.b16 %v633, %v626
    %v767 = vpack.c.b16 %v634, %v627
    %v768 = vpack.c.b16 %v642, %v635
    %v769 = vpack.c.b16 %v643, %v636
    %v770 = vpack.c.b16 %v644, %v637
    %v771 = vpack.c.b16 %v645, %v638
    %v772 = vpack.c.b16 %v646, %v639
    %v773 = vpack.c.b16 %v647, %v640
    %v774 = vpack.c.b16 %v648, %v641
    %v775 = vpack.c.b16 %v656, %v649
    %v776 = vpack.c.b16 %v657, %v650
    %v777 = vpack.c.b16 %v658, %v651
    %v778 = vpack.c.b16 %v659, %v652
    %v779 = vpack.c.b16 %v660, %v653
    %v780 = vpack.c.b16 %v661, %v654
    %v781 = vpack.c.b16 %v662, %v655
    %v782 = vpack.c.b16 %v670, %v663
    %v783 = vpack.c.b16 %v671, %v664
    %v784 = vpack.c.b16 %v672, %v665
    %v785 = vpack.c.b16 %v673, %v666
    %v786 = vpack.c.b16 %v674, %v667
    %v787 = vpack.c.b16 %v675, %v668
    %v788 = vpack.c.b16 %v676, %v669
    %901 = vmatprep.subr.bf16.mxu0 %v678
    %902 = vmatpush1.bf16.msra.mxu0 %v677
    %903 = vmatprep.subr.bf16.mxu0 %v685
    %904 = vmatpush1.bf16.msra.mxu0 %v684
    %905 = vmatprep.subr.bf16.mxu0 %v692
    %906 = vmatpush1.bf16.msra.mxu0 %v691
    %907 = vmatprep.subr.bf16.mxu0 %v699
    %908 = vmatpush1.bf16.msra.mxu0 %v698
    %909 = vmatprep.subr.bf16.mxu0 %v706
    %910 = vmatpush1.bf16.msra.mxu0 %v705
    %911 = vmatprep.subr.bf16.mxu0 %v713
    %912 = vmatpush1.bf16.msra.mxu0 %v712
    %913 = vmatprep.subr.bf16.mxu0 %v720
    %914 = vmatpush1.bf16.msra.mxu0 %v719
    %915 = vmatprep.subr.bf16.mxu0 %v727
    %916 = vmatpush1.bf16.msra.mxu0 %v726
    %917 = vmatprep.subr.bf16.mxu0 %v734
    %918 = vmatpush1.bf16.msra.mxu0 %v733
    %919 = vmatprep.subr.bf16.mxu0 %v741
    %920 = vmatpush1.bf16.msra.mxu0 %v740
    %921 = vmatprep.subr.bf16.mxu0 %v748
    %922 = vmatpush1.bf16.msra.mxu0 %v747
    %923 = vmatprep.subr.bf16.mxu0 %v755
    %924 = vmatpush1.bf16.msra.mxu0 %v754
    %925 = vmatprep.subr.bf16.mxu0 %v762
    %926 = vmatpush1.bf16.msra.mxu0 %v761
    %927 = vmatprep.subr.bf16.mxu0 %v769
    %928 = vmatpush1.bf16.msra.mxu0 %v768
    %929 = vmatprep.subr.bf16.mxu0 %v776
    %930 = vmatpush1.bf16.msra.mxu0 %v775
    %931 = vmatprep.subr.bf16.mxu0 %v783
    %932 = vmatpush1.bf16.msra.mxu0 %v782
    %933 = vmatprep.mubr.bf16.mxu0 %v159
    %934 = vmatmul.mubr.bf16.gmra.mrb[0].mxu0 %v158
    %v935 = vpop.f32.mrb[0].mxu0
    %v936 = vadd.f32 %v293, %v935
    %v937 = vpop.f32.mrb[0].mxu0
    %v938 = vadd.f32 %v297, %v937
    %v939 = vpop.f32.mrb[0].mxu0
    %v940 = vpop.f32.mrb[0].mxu0
    %941 = vdwg.mxu0
    %942 = vmatprep.subr.bf16.mxu0 %v680
    %943 = vmatpush1.bf16.msra.mxu0 %v679
    %944 = vmatprep.subr.bf16.mxu0 %v687
    %945 = vmatpush1.bf16.msra.mxu0 %v686
    %946 = vmatprep.subr.bf16.mxu0 %v694
    %947 = vmatpush1.bf16.msra.mxu0 %v693
    %948 = vmatprep.subr.bf16.mxu0 %v701
    %949 = vmatpush1.bf16.msra.mxu0 %v700
    %950 = vmatprep.subr.bf16.mxu0 %v708
    %951 = vmatpush1.bf16.msra.mxu0 %v707
    %952 = vmatprep.subr.bf16.mxu0 %v715
    %953 = vmatpush1.bf16.msra.mxu0 %v714
    %954 = vmatprep.subr.bf16.mxu0 %v722
    %955 = vmatpush1.bf16.msra.mxu0 %v721
    %956 = vmatprep.subr.bf16.mxu0 %v729
    %957 = vmatpush1.bf16.msra.mxu0 %v728
    %958 = vmatprep.subr.bf16.mxu0 %v736
    %959 = vmatpush1.bf16.msra.mxu0 %v735
    %960 = vmatprep.subr.bf16.mxu0 %v743
    %961 = vmatpush1.bf16.msra.mxu0 %v742
    %962 = vmatprep.subr.bf16.mxu0 %v750
    %963 = vmatpush1.bf16.msra.mxu0 %v749
    %964 = vmatprep.subr.bf16.mxu0 %v757
    %965 = vmatpush1.bf16.msra.mxu0 %v756
    %966 = vmatprep.subr.bf16.mxu0 %v764
    %967 = vmatpush1.bf16.msra.mxu0 %v763
    %968 = vmatprep.subr.bf16.mxu0 %v771
    %969 = vmatpush1.bf16.msra.mxu0 %v770
    %970 = vmatprep.subr.bf16.mxu0 %v778
    %971 = vmatpush1.bf16.msra.mxu0 %v777
    %972 = vmatprep.subr.bf16.mxu0 %v785
    %973 = vmatpush1.bf16.msra.mxu0 %v784
    %974 = vmatprep.mubr.bf16.mxu0 %v159
    %975 = vmatmul.mubr.bf16.gmra.mrb[0].mxu0 %v158
    %v976 = vpop.f32.mrb[0].mxu0
    %v977 = vadd.f32 %v301, %v976
    %v978 = vpop.f32.mrb[0].mxu0
    %v979 = vadd.f32 %v305, %v978
    %v980 = vpop.f32.mrb[0].mxu0
    %v981 = vpop.f32.mrb[0].mxu0
    %982 = vdwg.mxu0
    %983 = vmatprep.subr.bf16.mxu0 %v682
    %984 = vmatpush1.bf16.msra.mxu0 %v681
    %985 = vmatprep.subr.bf16.mxu0 %v689
    %986 = vmatpush1.bf16.msra.mxu0 %v688
    %987 = vmatprep.subr.bf16.mxu0 %v696
    %988 = vmatpush1.bf16.msra.mxu0 %v695
    %989 = vmatprep.subr.bf16.mxu0 %v703
    %990 = vmatpush1.bf16.msra.mxu0 %v702
    %991 = vmatprep.subr.bf16.mxu0 %v710
    %992 = vmatpush1.bf16.msra.mxu0 %v709
    %993 = vmatprep.subr.bf16.mxu0 %v717
    %994 = vmatpush1.bf16.msra.mxu0 %v716
    %995 = vmatprep.subr.bf16.mxu0 %v724
    %996 = vmatpush1.bf16.msra.mxu0 %v723
    %997 = vmatprep.subr.bf16.mxu0 %v731
    %998 = vmatpush1.bf16.msra.mxu0 %v730
    %999 = vmatprep.subr.bf16.mxu0 %v738
    %1000 = vmatpush1.bf16.msra.mxu0 %v737
    %1001 = vmatprep.subr.bf16.mxu0 %v745
    %1002 = vmatpush1.bf16.msra.mxu0 %v744
    %1003 = vmatprep.subr.bf16.mxu0 %v752
    %1004 = vmatpush1.bf16.msra.mxu0 %v751
    %1005 = vmatprep.subr.bf16.mxu0 %v759
    %1006 = vmatpush1.bf16.msra.mxu0 %v758
    %1007 = vmatprep.subr.bf16.mxu0 %v766
    %1008 = vmatpush1.bf16.msra.mxu0 %v765
    %1009 = vmatprep.subr.bf16.mxu0 %v773
    %1010 = vmatpush1.bf16.msra.mxu0 %v772
    %1011 = vmatprep.subr.bf16.mxu0 %v780
    %1012 = vmatpush1.bf16.msra.mxu0 %v779
    %1013 = vmatprep.subr.bf16.mxu0 %v787
    %1014 = vmatpush1.bf16.msra.mxu0 %v786
    %1015 = vmatprep.mubr.bf16.mxu0 %v159
    %1016 = vmatmul.mubr.bf16.gmra.mrb[0].mxu0 %v158
    %v1017 = vpop.f32.mrb[0].mxu0
    %v1018 = vadd.f32 %v309, %v1017
    %v1019 = vpop.f32.mrb[0].mxu0
    %v1020 = vadd.f32 %v313, %v1019
    %v1021 = vpop.f32.mrb[0].mxu0
    %v1022 = vpop.f32.mrb[0].mxu0
    %1023 = vdwg.mxu0
    %1024 = vmatprep.subr.bf16.mxu0 0
    %1025 = vmatpush1.bf16.msra.mxu0 %v683
    %1026 = vmatprep.subr.bf16.mxu0 0
    %1027 = vmatpush1.bf16.msra.mxu0 %v690
    %1028 = vmatprep.subr.bf16.mxu0 0
    %1029 = vmatpush1.bf16.msra.mxu0 %v697
    %1030 = vmatprep.subr.bf16.mxu0 0
    %1031 = vmatpush1.bf16.msra.mxu0 %v704
    %1032 = vmatprep.subr.bf16.mxu0 0
    %1033 = vmatpush1.bf16.msra.mxu0 %v711
    %1034 = vmatprep.subr.bf16.mxu0 0
    %1035 = vmatpush1.bf16.msra.mxu0 %v718
    %1036 = vmatprep.subr.bf16.mxu0 0
    %1037 = vmatpush1.bf16.msra.mxu0 %v725
    %1038 = vmatprep.subr.bf16.mxu0 0
    %1039 = vmatpush1.bf16.msra.mxu0 %v732
    %1040 = vmatprep.subr.bf16.mxu0 0
    %1041 = vmatpush1.bf16.msra.mxu0 %v739
    %1042 = vmatprep.subr.bf16.mxu0 0
    %1043 = vmatpush1.bf16.msra.mxu0 %v746
    %1044 = vmatprep.subr.bf16.mxu0 0
    %1045 = vmatpush1.bf16.msra.mxu0 %v753
    %1046 = vmatprep.subr.bf16.mxu0 0
    %1047 = vmatpush1.bf16.msra.mxu0 %v760
    %1048 = vmatprep.subr.bf16.mxu0 0
    %1049 = vmatpush1.bf16.msra.mxu0 %v767
    %1050 = vmatprep.subr.bf16.mxu0 0
    %1051 = vmatpush1.bf16.msra.mxu0 %v774
    %1052 = vmatprep.subr.bf16.mxu0 0
    %1053 = vmatpush1.bf16.msra.mxu0 %v781
    %1054 = vmatprep.subr.bf16.mxu0 0
    %1055 = vmatpush1.bf16.msra.mxu0 %v788
    %1056 = vmatprep.mubr.bf16.mxu0 %v159
    %1057 = vmatmul.mubr.bf16.gmra.mrb[0].mxu0 %v158
    %v1058 = vpop.f32.mrb[0].mxu0
    %v1059 = vadd.f32 %v317, %v1058
    %v1060 = vpop.f32.mrb[0].mxu0
    %v1061 = vpop.f32.mrb[0].mxu0
    %v1062 = vpop.f32.mrb[0].mxu0
    %1063 = vdwg.mxu0
    %v1064 = vxor.u32 %v936, 2147483648
    %v1065 = vxor.u32 %v938, 2147483648
    %v1066 = vxor.u32 %v977, 2147483648
    %v1067 = vxor.u32 %v979, 2147483648
    %v1068 = vxor.u32 %v1018, 2147483648
    %v1069 = vxor.u32 %v1020, 2147483648
    %v1070 = vxor.u32 %v1059, 2147483648
    %v1071 = vmul.f32 %v1064, 1.442695
    %v1072 = vpow.pop %v1071
    %v1073 = vmul.f32 %v1065, 1.442695
    %v1074 = vpow.pop %v1073
    %v1075 = vmul.f32 %v1066, 1.442695
    %v1076 = vpow.pop %v1075
    %v1077 = vmul.f32 %v1067, 1.442695
    %v1078 = vpow.pop %v1077
    %v1079 = vmul.f32 %v1068, 1.442695
    %v1080 = vpow.pop %v1079
    %v1081 = vmul.f32 %v1069, 1.442695
    %v1082 = vpow.pop %v1081
    %v1083 = vmul.f32 %v1070, 1.442695
    %v1084 = vpow.pop %v1083
    %v1085 = vadd.f32 %v1072, 1.0
    %v1086 = vadd.f32 %v1074, 1.0
    %v1087 = vadd.f32 %v1076, 1.0
    %v1088 = vadd.f32 %v1078, 1.0
    %v1089 = vadd.f32 %v1080, 1.0
    %v1090 = vadd.f32 %v1082, 1.0
    %v1091 = vadd.f32 %v1084, 1.0
    %v1092 = vrcp.pop %v1085
    %v1093 = vmul.f32 1.0, %v1092
    %v1094 = vrcp.pop %v1086
    %v1095 = vmul.f32 1.0, %v1094
    %v1096 = vrcp.pop %v1087
    %v1097 = vmul.f32 1.0, %v1096
    %v1098 = vrcp.pop %v1088
    %v1099 = vmul.f32 1.0, %v1098
    %v1100 = vrcp.pop %v1089
    %v1101 = vmul.f32 1.0, %v1100
    %v1102 = vrcp.pop %v1090
    %v1103 = vmul.f32 1.0, %v1102
    %v1104 = vrcp.pop %v1091
    %v1105 = vmul.f32 1.0, %v1104
    %1106 = vst [vmem:[#allocation7] sm:$0xff] %v1093
    %1107 = vst [vmem:[#allocation7 + $0x8] sm:$0xff] %v1095
    %1108 = vst [vmem:[#allocation7 + $0x10] sm:$0xff] %v1097
    %1109 = vst [vmem:[#allocation7 + $0x18] sm:$0xff] %v1099
    %1110 = vst [vmem:[#allocation7 + $0x20] sm:$0xff] %v1101
    %1111 = vst [vmem:[#allocation7 + $0x28] sm:$0xff] %v1103
    %1112 = vst [vmem:[#allocation7 + $0x30] sm:$0xff] %v1105
    // Predicated region
    $region30: #{_ae_decoder_impl.1} parent=1 // pred_check
      _
    $region31: #{_ae_decoder_impl.1} parent=1 // pred_check_branch
      %1114 = sbr.rel (0) target = $region33
    $region32: #{_ae_decoder_impl.1} parent=1 // pred_region
      %s1116 = ssub.s32 896, 896
      %1117 = vsyncadd [#allocation4], %s1116
      %s1119 = sshll.u32 [#allocation7], 4
      %s1120 = int_to_ptr.vmem [resolvable:$true] %s1119
      %1122 = dma.vmem_to_hbm [thread:$0]  %s1120, 896, %s5, [#allocation4]
    $region33: #{_ae_decoder_impl.1} parent=1 // pred_fallthru
      _
    // Predicated region
    $region34: #{_ae_decoder_impl.1} parent=1 // pred_check
      _
    $region35: #{_ae_decoder_impl.1} parent=1 // pred_check_branch
      %1124 = sbr.rel (0) target = $region37
    $region36: #{_ae_decoder_impl.1} parent=1 // pred_region
      %1125 = dma.done [#allocation4], 896
    $region37: #{_ae_decoder_impl.1} parent=1 // pred_fallthru
      _
    %1126 = vsyncpa [#allocation3], 1
    %1127 = vsyncpa [#allocation6], 1
    %1128 = vsyncpa [#allocation4], 1

</llo_original>
